<compile_context>
chip_gen: v7x
topology: tpu7x:2x2x1
jax: 0.10.0
libtpu: 0.0.40
codegen_flags: <defaults>
</compile_context>

<pallas_src>
import functools

import numpy as np
import jax
import jax.numpy as jnp
from jax.experimental import pallas as pl
from jax.experimental.pallas import tpu as pltpu


def _round_up(x, m):
    return ((x + m - 1) // m) * m


def _proto_loss_kernel(emb_ref, srow_ref, info_ref, loss_ref, acc_ref,
                       cross_ref, psq_ref, *, n_classes, inv_ns, inv_nq):
    # emb_ref  : (Np, tD)   zero-padded embeddings chunk, MXU dtype (bf16 or f32)
    # srow_ref : (1, Np)    int32: class id if row is a support row, else NCp
    # info_ref : (Np, 1)    int32: target class if row is a query row, else NCp
    # cross_ref: (Np, NCp)  f32 scratch, accumulates q . p over D chunks
    # psq_ref  : (1, NCp)   f32 scratch, accumulates ||p||^2 over D chunks
    k = pl.program_id(0)
    emb = emb_ref[...]
    n_pad, block_d = emb.shape
    ncp = cross_ref.shape[1]

    # ---- prototype selection one-hot (NCp, Np): a single compare pass --------
    proto_row = jax.lax.broadcasted_iota(jnp.int32, (ncp, n_pad), 0)
    psel = jnp.where(proto_row == srow_ref[...], 1.0, 0.0).astype(emb.dtype)

    # fused gather + mean on the MXU; 1/n_shots scale applied on the VPU after
    protos = jnp.dot(psel, emb, preferred_element_type=jnp.float32) * inv_ns   # (NCp, tD) f32

    # ---- distance pieces for ALL rows (query selection handled via info_ref) -
    cross_part = jax.lax.dot_general(
        emb, protos.astype(emb.dtype), (((1,), (1,)), ((), ())),
        preferred_element_type=jnp.float32)                                    # (Np, NCp)
    psq_part = jax.lax.dot_general(
        jnp.ones((1, block_d), jnp.float32), protos * protos,
        (((1,), (1,)), ((), ())), preferred_element_type=jnp.float32)          # (1, NCp)

    @pl.when(k == 0)
    def _():
        cross_ref[...] = cross_part
        psq_ref[...] = psq_part

    @pl.when(k > 0)
    def _():
        cross_ref[...] += cross_part
        psq_ref[...] += psq_part

    @pl.when(k == pl.num_programs(0) - 1)
    def _():
        # logits = -||q - p||^2 up to a per-row constant (||q||^2 dropped:
        # log_softmax is shift-invariant per row)
        logits = 2.0 * cross_ref[...] - psq_ref[...]
        col = jax.lax.broadcasted_iota(jnp.int32, (n_pad, ncp), 1)
        logits = jnp.where(col < n_classes, logits, jnp.float32(-1e30))

        # log_softmax over classes, f32 throughout (v5e-friendly)
        m = jnp.max(logits, axis=1, keepdims=True)
        e = jnp.exp(logits - m)
        log_p = (logits - m) - jnp.log(jnp.sum(e, axis=1, keepdims=True))

        tgt = info_ref[...]                        # (Np, 1); sentinel NCp = not a query
        onehot = col == tgt
        loss_ref[0, 0] = -jnp.sum(jnp.where(onehot, log_p, 0.0)) * inv_nq

        # accuracy with first-index tie-break (matches torch.max / jnp.argmax)
        row_max = jnp.max(log_p, axis=1, keepdims=True)
        cand = jnp.where(log_p == row_max, col, jnp.int32(ncp))
        y_hat = jnp.min(cand, axis=1, keepdims=True)
        acc_ref[0, 0] = jnp.sum((y_hat == tgt).astype(jnp.float32)) * inv_nq


@functools.partial(jax.jit,
                   static_argnames=("n_classes", "n_query", "n_support",
                                    "use_bf16", "block_d"))
def _episode_loss(embeddings, srow_cls, row_info, *, n_classes, n_query,
                  n_support, use_bf16, block_d):
    """Jitted fused path: pad + single D-tiled pallas_call (protos + loss + acc)."""
    n, d = embeddings.shape
    n_pad = srow_cls.shape[1]
    ncp = _round_up(n_classes, 8)
    mxu_dtype = jnp.bfloat16 if use_bf16 else jnp.float32

    if block_d is None:
        d_pad = _round_up(d, 128)
        block_d = next(bd for bd in (512, 384, 256, 128) if d_pad % bd == 0)
    else:
        assert block_d % 128 == 0, "block_d must be a multiple of 128 lanes"
        d_pad = _round_up(d, block_d)
    grid = (d_pad // block_d,)

    emb_p = jnp.pad(embeddings.astype(mxu_dtype),
                    ((0, n_pad - n), (0, d_pad - d)))

    itemsize = 2 if use_bf16 else 4
    # VMEM budget: emb chunk (double-buffered) + psel/protos + cross scratch and
    # softmax temporaries + padded int32 side arrays, with 2x headroom.
    est = (2 * n_pad * block_d * itemsize
           + ncp * n_pad * (4 + itemsize)
           + ncp * block_d * (4 + itemsize)
           + n_pad * ncp * 4 * 8
           + n_pad * 128 * 4 * 2 + n_pad * 8 * 4 * 2
           + (1 << 20))
    vmem_limit = int(min(64 * 1024 * 1024, max(4 * 1024 * 1024, 2 * est)))

    flops = 2 * d_pad * ncp * n_pad * 2 + 2 * d_pad * ncp
    cost = pl.CostEstimate(
        flops=int(flops),
        transcendentals=int(n_pad * (ncp + 1)),
        bytes_accessed=int(itemsize * n_pad * d_pad + 4 * 2 * n_pad + 8))

    kernel = functools.partial(_proto_loss_kernel, n_classes=n_classes,
                               inv_ns=1.0 / n_support,
                               inv_nq=1.0 / (n_classes * n_query))

    loss, acc = pl.pallas_call(
        kernel,
        out_shape=(jax.ShapeDtypeStruct((1, 1), jnp.float32),
                   jax.ShapeDtypeStruct((1, 1), jnp.float32)),
        grid=grid,
        in_specs=[
            pl.BlockSpec((n_pad, block_d), lambda k: (0, k)),   # emb: D-tiled
            pl.BlockSpec((1, n_pad), lambda k: (0, 0)),         # support class per row
            pl.BlockSpec((n_pad, 1), lambda k: (0, 0)),         # query target per row
        ],
        out_specs=(
            pl.BlockSpec(memory_space=pltpu.MemorySpace.SMEM),
            pl.BlockSpec(memory_space=pltpu.MemorySpace.SMEM),
        ),
        scratch_shapes=[
            pltpu.VMEM((n_pad, ncp), jnp.float32),              # cross accumulator
            pltpu.VMEM((1, ncp), jnp.float32),                  # ||p||^2 accumulator
        ],
        compiler_params=pltpu.CompilerParams(
            dimension_semantics=("arbitrary",),                 # D is a reduction axis
            vmem_limit_bytes=vmem_limit),
        cost_estimate=cost,
    )(emb_p, srow_cls, row_info)
    # TODO(synk): batch many episodes per call (extra "parallel" grid axis) to use
    # both v7x TensorCores and amortize launch / host-sync overhead for tiny episodes.
    return loss[0, 0], acc[0, 0]


def prototypical_loss_pallas(embeddings, target, n_support, *, use_bf16=True,
                             block_d=None):
    """Mirrors PrototypicalLoss(n_support).forward(embeddings, target)."""
    # Host-side episode index extraction (the PyTorch original also syncs here via
    # torch.unique / nonzero / .item()); everything downstream is fused + jitted.
    tgt_np = np.asarray(jax.device_get(target))
    classes = np.unique(tgt_np)                      # sorted, like torch.unique
    n_classes = int(len(classes))
    n_query = int((tgt_np == classes[0]).sum()) - n_support

    n = int(embeddings.shape[0])
    n_pad = _round_up(n, 8)
    ncp = _round_up(n_classes, 8)

    # Per-row int32 metadata (sentinel NCp never matches a class column):
    #   srow_cls[0, r] = class index c if row r is one of c's first n_support rows
    #   row_info[r, 0] = class index c if row r is one of c's query rows
    srow_cls = np.full((1, n_pad), ncp, np.int32)
    row_info = np.full((n_pad, 1), ncp, np.int32)
    for ci, c in enumerate(classes):
        rows = np.nonzero(tgt_np == c)[0]
        srow_cls[0, rows[:n_support]] = ci
        row_info[rows[n_support:], 0] = ci

    return _episode_loss(embeddings, jnp.asarray(srow_cls), jnp.asarray(row_info),
                         n_classes=n_classes, n_query=n_query, n_support=n_support,
                         use_bf16=use_bf16, block_d=block_d)


def _reference(embeddings, target, n_support):
    """Pure-JAX f32 reference (same math as the PyTorch module)."""
    tgt_np = np.asarray(jax.device_get(target))
    classes = np.unique(tgt_np)
    n_query = int((tgt_np == classes[0]).sum()) - n_support
    supp_idxs = np.stack([np.nonzero(tgt_np == c)[0][:n_support] for c in classes])
    query_idxs = np.concatenate([np.nonzero(tgt_np == c)[0][n_support:] for c in classes])

    protos = embeddings[jnp.asarray(supp_idxs)].mean(axis=1)
    q = embeddings[jnp.asarray(query_idxs)]
    d = jnp.sum((q[:, None, :] - protos[None, :, :]) ** 2, axis=2)
    logp = jax.nn.log_softmax(-d, axis=1)
    tgt = jnp.repeat(jnp.arange(len(classes)), n_query)
    loss = -jnp.mean(logp[jnp.arange(q.shape[0]), tgt])
    acc = jnp.mean((jnp.argmax(logp, axis=1) == tgt).astype(jnp.float32))
    return loss, acc


if __name__ == "__main__":
    # small episode: 4 classes, 3 support + 5 query shots each, D=200
    n_classes, n_support, n_query, D = 4, 3, 5, 200
    n_per_class = n_support + n_query
    N = n_classes * n_per_class

    key = jax.random.PRNGKey(0)
    k_emb, k_perm = jax.random.split(key)
    embeddings = jax.random.normal(k_emb, (N, D), dtype=jnp.float32)
    # each class appears exactly n_support + n_query times, deterministically shuffled
    target = jnp.repeat(jnp.arange(n_classes, dtype=jnp.int32), n_per_class)
    target = jax.random.permutation(k_perm, target)

    ref_loss, ref_acc = _reference(embeddings, target, n_support)
    ref_loss, ref_acc = np.asarray(ref_loss), np.asarray(ref_acc)

    # 1) exact-semantics check: f32 MXU path (auto block_d -> single D chunk here)
    loss32, acc32 = prototypical_loss_pallas(embeddings, target, n_support,
                                             use_bf16=False)
    loss32, acc32 = jax.block_until_ready((loss32, acc32))
    np.testing.assert_allclose(np.asarray(loss32), ref_loss, rtol=1e-3, atol=1e-3)
    np.testing.assert_allclose(np.asarray(acc32), ref_acc, rtol=0, atol=1e-6)

    # 2) fast path: bf16 MXU feed + D-reduction grid (block_d=128 -> 2 grid steps)
    #    bf16 rounding perturbs logits slightly, so loss tolerance is loose and
    #    accuracy is allowed to differ by up to 2 flipped queries.
    loss_bf, acc_bf = prototypical_loss_pallas(embeddings, target, n_support,
                                               use_bf16=True, block_d=128)
    loss_bf, acc_bf = jax.block_until_ready((loss_bf, acc_bf))
    np.testing.assert_allclose(np.asarray(loss_bf), ref_loss, rtol=5e-2, atol=0.5)
    assert abs(float(acc_bf) - float(ref_acc)) <= 2.0 / (n_classes * n_query) + 1e-6

    print("KERNEL_OK")
</pallas_src>

<mosaic_0001>
module attributes {stable_mosaic.version = 11 : i64} {
  func.func @_proto_loss_kernel(%arg0: i32, %arg1: memref<32x256xf32, #tpu.memory_space<vmem>>, %arg2: memref<1x32xi32, #tpu.memory_space<vmem>>, %arg3: memref<32x1xi32, #tpu.memory_space<vmem>>, %arg4: memref<1x1xf32, #tpu.memory_space<smem>>, %arg5: memref<1x1xf32, #tpu.memory_space<smem>>, %arg6: memref<32x8xf32, #tpu.memory_space<vmem>>, %arg7: memref<1x8xf32, #tpu.memory_space<vmem>>) attributes {dimension_semantics = [#tpu.dimension_semantics<arbitrary>], iteration_bounds = array<i64: 1>, scalar_prefetch = 0 : i64, scratch_operands = 2 : i64, tpu.core_type = #tpu.core_type<tc>, window_params = [{transform_indices = @transform_0, window_bounds = array<i64: 32, 256>}, {pipeline_mode = #tpu.pipeline_mode<synchronous>, transform_indices = @transform_1, window_bounds = array<i64: 1, 32>}, {pipeline_mode = #tpu.pipeline_mode<synchronous>, transform_indices = @transform_2, window_bounds = array<i64: 32, 1>}, {transform_indices = @transform_3, window_bounds = array<i64: 1, 1>}, {transform_indices = @transform_4, window_bounds = array<i64: 1, 1>}]} {
    %c0 = arith.constant 0 : index
    %c0_0 = arith.constant 0 : index
    %0 = vector.load %arg1[%c0, %c0_0] : memref<32x256xf32, #tpu.memory_space<vmem>>, vector<32x256xf32>
    %1 = tpu.iota {dimensions = array<i32: 0>} : vector<8x32xi32>
    %c0_1 = arith.constant 0 : index
    %c0_2 = arith.constant 0 : index
    %2 = vector.load %arg2[%c0_1, %c0_2] : memref<1x32xi32, #tpu.memory_space<vmem>>, vector<1x32xi32>
    %3 = vector.broadcast %2 : vector<1x32xi32> to vector<8x32xi32>
    %4 = arith.cmpi eq, %1, %3 : vector<8x32xi32>
    %cst = arith.constant 1.000000e+00 : f32
    %cst_3 = arith.constant 0.000000e+00 : f32
    %5 = vector.broadcast %cst : f32 to vector<8x32xf32>
    %6 = vector.broadcast %cst_3 : f32 to vector<8x32xf32>
    %7 = arith.select %4, %5, %6 : vector<8x32xi1>, vector<8x32xf32>
    %cst_4 = arith.constant dense<0.000000e+00> : vector<8x256xf32>
    %8 = tpu.matmul %7, %0, %cst_4 {dimension_numbers = #tpu.dot_dimension_numbers<[1], [0], [0], [1], [0, 0, 1, 1], [], []>} : vector<8x32xf32>, vector<32x256xf32>, vector<8x256xf32> -> vector<8x256xf32>
    %cst_5 = arith.constant 0.333333343 : f32
    %9 = vector.broadcast %cst_5 : f32 to vector<8x256xf32>
    %10 = arith.mulf %8, %9 : vector<8x256xf32>
    %cst_6 = arith.constant dense<0.000000e+00> : vector<32x8xf32>
    %11 = tpu.matmul %0, %10, %cst_6 {dimension_numbers = #tpu.dot_dimension_numbers<[1], [1], [0], [0], [0, 0, 1, 0], [], []>} : vector<32x256xf32>, vector<8x256xf32>, vector<32x8xf32> -> vector<32x8xf32>
    %cst_7 = arith.constant 1.000000e+00 : f32
    %12 = vector.broadcast %cst_7 : f32 to vector<1x256xf32>
    %13 = arith.mulf %10, %10 : vector<8x256xf32>
    %cst_8 = arith.constant dense<0.000000e+00> : vector<1x8xf32>
    %14 = tpu.matmul %12, %13, %cst_8 {dimension_numbers = #tpu.dot_dimension_numbers<[1], [1], [0], [0], [0, 0, 1, 0], [], []>} : vector<1x256xf32>, vector<8x256xf32>, vector<1x8xf32> -> vector<1x8xf32>
    %c0_i32 = arith.constant 0 : i32
    %15 = arith.cmpi eq, %arg0, %c0_i32 : i32
    %16 = arith.extui %15 : i1 to i32
    %c0_i32_9 = arith.constant 0 : i32
    %17 = arith.cmpi ne, %16, %c0_i32_9 : i32
    scf.if %17 {
      %c0_14 = arith.constant 0 : index
      %c0_15 = arith.constant 0 : index
      %24 = vector.load %arg6[%c0_14, %c0_15] : memref<32x8xf32, #tpu.memory_space<vmem>>, vector<32x8xf32>
      tpu.vector_store %arg6[%c0_14, %c0_15], %11 {strides = array<i32>} : memref<32x8xf32, #tpu.memory_space<vmem>>, vector<32x8xf32>,
      %c0_16 = arith.constant 0 : index
      %c0_17 = arith.constant 0 : index
      %25 = vector.load %arg7[%c0_16, %c0_17] : memref<1x8xf32, #tpu.memory_space<vmem>>, vector<1x8xf32>
      tpu.vector_store %arg7[%c0_16, %c0_17], %14 {strides = array<i32>} : memref<1x8xf32, #tpu.memory_space<vmem>>, vector<1x8xf32>,
    } else {
    }
    %c0_i32_10 = arith.constant 0 : i32
    %18 = arith.cmpi sgt, %arg0, %c0_i32_10 : i32
    %19 = arith.extui %18 : i1 to i32
    %c0_i32_11 = arith.constant 0 : i32
    %20 = arith.cmpi ne, %19, %c0_i32_11 : i32
    scf.if %20 {
      %c0_14 = arith.constant 0 : index
      %c0_15 = arith.constant 0 : index
      %24 = vector.load %arg6[%c0_14, %c0_15] : memref<32x8xf32, #tpu.memory_space<vmem>>, vector<32x8xf32>
      %25 = arith.addf %24, %11 : vector<32x8xf32>
      %c0_16 = arith.constant 0 : index
      %c0_17 = arith.constant 0 : index
      %26 = vector.load %arg6[%c0_16, %c0_17] : memref<32x8xf32, #tpu.memory_space<vmem>>, vector<32x8xf32>
      tpu.vector_store %arg6[%c0_16, %c0_17], %25 {strides = array<i32>} : memref<32x8xf32, #tpu.memory_space<vmem>>, vector<32x8xf32>,
      %c0_18 = arith.constant 0 : index
      %c0_19 = arith.constant 0 : index
      %27 = vector.load %arg7[%c0_18, %c0_19] : memref<1x8xf32, #tpu.memory_space<vmem>>, vector<1x8xf32>
      %28 = arith.addf %27, %14 : vector<1x8xf32>
      %c0_20 = arith.constant 0 : index
      %c0_21 = arith.constant 0 : index
      %29 = vector.load %arg7[%c0_20, %c0_21] : memref<1x8xf32, #tpu.memory_space<vmem>>, vector<1x8xf32>
      tpu.vector_store %arg7[%c0_20, %c0_21], %28 {strides = array<i32>} : memref<1x8xf32, #tpu.memory_space<vmem>>, vector<1x8xf32>,
    } else {
    }
    %c0_i32_12 = arith.constant 0 : i32
    %21 = arith.cmpi eq, %arg0, %c0_i32_12 : i32
    %22 = arith.extui %21 : i1 to i32
    %c0_i32_13 = arith.constant 0 : i32
    %23 = arith.cmpi ne, %22, %c0_i32_13 : i32
    scf.if %23 {
      %c0_14 = arith.constant 0 : index
      %c0_15 = arith.constant 0 : index
      %24 = vector.load %arg6[%c0_14, %c0_15] : memref<32x8xf32, #tpu.memory_space<vmem>>, vector<32x8xf32>
      %cst_16 = arith.constant 2.000000e+00 : f32
      %25 = vector.broadcast %cst_16 : f32 to vector<32x8xf32>
      %26 = arith.mulf %25, %24 : vector<32x8xf32>
      %c0_17 = arith.constant 0 : index
      %c0_18 = arith.constant 0 : index
      %27 = vector.load %arg7[%c0_17, %c0_18] : memref<1x8xf32, #tpu.memory_space<vmem>>, vector<1x8xf32>
      %28 = vector.broadcast %27 : vector<1x8xf32> to vector<32x8xf32>
      %29 = arith.subf %26, %28 : vector<32x8xf32>
      %30 = tpu.iota {dimensions = array<i32: 1>} : vector<32x8xi32>
      %c4_i32 = arith.constant 4 : i32
      %31 = vector.broadcast %c4_i32 : i32 to vector<32x8xi32>
      %32 = arith.cmpi slt, %30, %31 : vector<32x8xi32>
      %cst_19 = arith.constant -1.000000e+30 : f32
      %33 = vector.broadcast %cst_19 : f32 to vector<32x8xf32>
      %34 = arith.select %32, %29, %33 : vector<32x8xi1>, vector<32x8xf32>
      %cst_20 = arith.constant dense<0xFF800000> : vector<32xf32>
      %35 = vector.multi_reduction <maximumf>, %34, %cst_20 [1] : vector<32x8xf32> to vector<32xf32>
      %36 = vector.shape_cast %35 : vector<32xf32> to vector<32x1xf32>
      %37 = vector.broadcast %36 : vector<32x1xf32> to vector<32x8xf32>
      %38 = arith.subf %34, %37 : vector<32x8xf32>
      %39 = math.exp %38 : vector<32x8xf32>
      %40 = vector.broadcast %36 : vector<32x1xf32> to vector<32x8xf32>
      %41 = arith.subf %34, %40 : vector<32x8xf32>
      %cst_21 = arith.constant dense<0.000000e+00> : vector<32xf32>
      %42 = vector.multi_reduction <add>, %39, %cst_21 [1] : vector<32x8xf32> to vector<32xf32>
      %43 = vector.shape_cast %42 : vector<32xf32> to vector<32x1xf32>
      %44 = math.log %43 : vector<32x1xf32>
      %45 = vector.broadcast %44 : vector<32x1xf32> to vector<32x8xf32>
      %46 = arith.subf %41, %45 : vector<32x8xf32>
      %c0_22 = arith.constant 0 : index
      %c0_23 = arith.constant 0 : index
      %47 = vector.load %arg3[%c0_22, %c0_23] : memref<32x1xi32, #tpu.memory_space<vmem>>, vector<32x1xi32>
      %48 = vector.broadcast %47 : vector<32x1xi32> to vector<32x8xi32>
      %49 = arith.cmpi eq, %30, %48 : vector<32x8xi32>
      %cst_24 = arith.constant 0.000000e+00 : f32
      %50 = vector.broadcast %cst_24 : f32 to vector<32x8xf32>
      %51 = arith.select %49, %46, %50 : vector<32x8xi1>, vector<32x8xf32>
      %52 = vector.shape_cast %51 : vector<32x8xf32> to vector<1x32x8xf32>
      %cst_25 = arith.constant dense<0.000000e+00> : vector<1xf32>
      %53 = vector.multi_reduction <add>, %52, %cst_25 [1, 2] : vector<1x32x8xf32> to vector<1xf32>
      %54 = vector.shape_cast %53 : vector<1xf32> to vector<1x1x1xf32>
      %55 = vector.extract %54[0, 0, 0] : f32 from vector<1x1x1xf32>
      %cst_26 = arith.constant 0.000000e+00 : f32
      %56 = arith.subf %cst_26, %55 : f32
      %cst_27 = arith.constant 5.000000e-02 : f32
      %57 = arith.mulf %56, %cst_27 : f32
      %c0_28 = arith.constant 0 : index
      %c0_29 = arith.constant 0 : index
      %58 = memref.load %arg4[%c0_28, %c0_29] : memref<1x1xf32, #tpu.memory_space<smem>>
      memref.store %57, %arg4[%c0_28, %c0_29] : memref<1x1xf32, #tpu.memory_space<smem>>
      %cst_30 = arith.constant dense<0xFF800000> : vector<32xf32>
      %59 = vector.multi_reduction <maximumf>, %46, %cst_30 [1] : vector<32x8xf32> to vector<32xf32>
      %60 = vector.shape_cast %59 : vector<32xf32> to vector<32x1xf32>
      %61 = vector.broadcast %60 : vector<32x1xf32> to vector<32x8xf32>
      %62 = arith.cmpf oeq, %46, %61 : vector<32x8xf32>
      %c8_i32 = arith.constant 8 : i32
      %63 = vector.broadcast %c8_i32 : i32 to vector<32x8xi32>
      %64 = arith.select %62, %30, %63 : vector<32x8xi1>, vector<32x8xi32>
      %cst_31 = arith.constant dense<2147483647> : vector<32xi32>
      %65 = vector.multi_reduction <minsi>, %64, %cst_31 [1] : vector<32x8xi32> to vector<32xi32>
      %66 = vector.shape_cast %65 : vector<32xi32> to vector<32x1xi32>
      %67 = arith.cmpi eq, %66, %47 : vector<32x1xi32>
      %68 = arith.extui %67 : vector<32x1xi1> to vector<32x1xi32>
      %69 = arith.sitofp %68 : vector<32x1xi32> to vector<32x1xf32>
      %70 = vector.shape_cast %69 : vector<32x1xf32> to vector<1x32x1xf32>
      %cst_32 = arith.constant dense<0.000000e+00> : vector<1xf32>
      %71 = vector.multi_reduction <add>, %70, %cst_32 [1, 2] : vector<1x32x1xf32> to vector<1xf32>
      %72 = vector.shape_cast %71 : vector<1xf32> to vector<1x1x1xf32>
      %73 = vector.extract %72[0, 0, 0] : f32 from vector<1x1x1xf32>
      %cst_33 = arith.constant 5.000000e-02 : f32
      %74 = arith.mulf %73, %cst_33 : f32
      %c0_34 = arith.constant 0 : index
      %c0_35 = arith.constant 0 : index
      %75 = memref.load %arg5[%c0_34, %c0_35] : memref<1x1xf32, #tpu.memory_space<smem>>
      memref.store %74, %arg5[%c0_34, %c0_35] : memref<1x1xf32, #tpu.memory_space<smem>>
    } else {
    }
    return
  }
  func.func @transform_0(%arg0: i32) -> (i32, i32) {
    %c0_i32 = arith.constant 0 : i32
    %c0_i32_0 = arith.constant 0 : i32
    return %c0_i32, %arg0 : i32, i32
  }
  func.func @transform_1(%arg0: i32) -> (i32, i32) {
    %c0_i32 = arith.constant 0 : i32
    %c0_i32_0 = arith.constant 0 : i32
    %c0_i32_1 = arith.constant 0 : i32
    return %c0_i32, %c0_i32_0 : i32, i32
  }
  func.func @transform_2(%arg0: i32) -> (i32, i32) {
    %c0_i32 = arith.constant 0 : i32
    %c0_i32_0 = arith.constant 0 : i32
    %c0_i32_1 = arith.constant 0 : i32
    return %c0_i32, %c0_i32_0 : i32, i32
  }
  func.func @transform_3(%arg0: i32) -> (i32, i32) {
    %c0_i32 = arith.constant 0 : i32
    %c0_i32_0 = arith.constant 0 : i32
    %c0_i32_1 = arith.constant 0 : i32
    return %c0_i32, %c0_i32_0 : i32, i32
  }
  func.func @transform_4(%arg0: i32) -> (i32, i32) {
    %c0_i32 = arith.constant 0 : i32
    %c0_i32_0 = arith.constant 0 : i32
    %c0_i32_1 = arith.constant 0 : i32
    return %c0_i32, %c0_i32_0 : i32, i32
  }
}

</mosaic_0001>

<llo_original>
// kernel: _episode_loss.1
$region0: #{_episode_loss.1}
  #allocation0 [shape = 'u32[]', space=smem, size = 0x4, offset = 0x4, fixed_abs, tag = 'smem constant byte address 0x4 - core index']
  #allocation1 [shape = 'u32[144,128]{1,0:T(1,128)}', space=vmem, size = 0x12000, scoped, tag = 'internal scratch']
  #allocation2 [shape = 'f32[32,8]{1,0:T(8,128)}', space=vmem, size = 0x4000, scoped, tag = 'scratch operand']
  #allocation3 [shape = 'f32[1,8]{1,0:T(1,128)}', space=vmem, size = 0x200, scoped, tag = 'scratch operand']
  %s0 = inlined_call_operand.vmem [shape: f32[32,256], index: 0, kind: input, shape index: {}]
  %s1 = inlined_call_operand.vmem [shape: s32[1,32], index: 1, kind: input, shape index: {}]
  %s2 = inlined_call_operand.vmem [shape: s32[32,1], index: 2, kind: input, shape index: {}]
  %s3 = inlined_call_operand.hbm [shape: f32[1,1], index: 3, kind: output, shape index: {0}]
  %s4 = inlined_call_operand.hbm [shape: f32[1,1], index: 4, kind: output, shape index: {1}]
  %5 = xla_tuple %s3, %s4
  %s6 = sld [smem:[#allocation0]]
  $region42: #{_episode_loss.1} parent=0
    _
  %s8 = ssub.s32 1, %s6
  %s9 = scalar_select 0, %s8, %s6
  $region1: #{_episode_loss.1} parent=0
    #allocation4 [shape = 'u8[512]{0}', space=smem, size = 0x200, scoped, tag = 'output window, operand 0, single buffered']
    #allocation5 [shape = 's32[1]{0}', space=sflag, size = 0x4, scoped, tag = 'scoped memory for _episode_loss.1']
    #allocation6 [shape = 'u8[512]{0}', space=smem, size = 0x200, scoped, tag = 'output window, operand 1, single buffered']
    #allocation7 [shape = 's32[1]{0}', space=sflag, size = 0x4, scoped, tag = 'scoped memory for _episode_loss.1']
    %10 = vsyncpa [#allocation5], 0
    %11 = vsyncpa [#allocation7], 0
    // Predicated region
    $region2: #{_episode_loss.1} parent=1 // pred_check
      _
    $region3: #{_episode_loss.1} parent=1 // pred_check_branch
      %13 = sbr.rel (0) target = $region5
    $region4: #{_episode_loss.1} parent=1 // pred_region
      _
    $region5: #{_episode_loss.1} parent=1 // pred_fallthru
      _
    // Predicated region
    $region6: #{_episode_loss.1} parent=1 // pred_check
      _
    $region7: #{_episode_loss.1} parent=1 // pred_check_branch
      %15 = sbr.rel (0) target = $region9
    $region8: #{_episode_loss.1} parent=1 // pred_region
      _
    $region9: #{_episode_loss.1} parent=1 // pred_fallthru
      _
    // Predicated region
    $region10: #{_episode_loss.1} parent=1 // pred_check
      _
    $region11: #{_episode_loss.1} parent=1 // pred_check_branch
      %17 = sbr.rel (0) target = $region13
    $region12: #{_episode_loss.1} parent=1 // pred_region
      _
    $region13: #{_episode_loss.1} parent=1 // pred_fallthru
      _
    %v18 = vld [vmem:[%s0] sm:$0xff]
    %v19 = vld [vmem:[%s0 + $0x8] sm:$0xff]
    %v20 = vld [vmem:[%s0 + $0x10] sm:$0xff]
    %v21 = vld [vmem:[%s0 + $0x18] sm:$0xff]
    %v22 = vld [vmem:[%s0 + $0x20] sm:$0xff]
    %v23 = vld [vmem:[%s0 + $0x28] sm:$0xff]
    %v24 = vld [vmem:[%s0 + $0x30] sm:$0xff]
    %v25 = vld [vmem:[%s0 + $0x38] sm:$0xff]
    %v26 = vlaneseq
    %v27 = vshrl.u32 %v26, 7
    %v28 = vld [vmem:[%s1] sm:$0x1]
    %v29 = vlaneseq
    %v30 = vshrl.u32 %v29, 7
    %v31 = vsub.s32 0, %v30
    %v32 = vrot.slane %v28, %v31
    %vm33 = vcmp.eq.s32.totalorder %v27, %v32
    %v34 = vsel %vm33, 1.0, 0.0
    %vm35 = vcmask 261120
    %v37 = vsel %vm35, %v34, 0
    %39 = vmatprep.subr.mxu0 %v19
    %40 = vmatpush1.msra.mxu0 %v18
    %41 = vmatprep.subr.mxu0 %v21
    %42 = vmatpush1.msra.mxu0 %v20
    %43 = vmatprep.subr.mxu0 %v23
    %44 = vmatpush1.msra.mxu0 %v22
    %45 = vmatprep.subr.mxu0 %v25
    %46 = vmatpush1.msra.mxu0 %v24
    %47 = vmatprep.subr.mxu0 0.0
    %48 = vmatpush1.msra.mxu0 0.0
    %49 = vmatprep.subr.mxu0 0.0
    %50 = vmatpush1.msra.mxu0 0.0
    %51 = vmatprep.subr.mxu0 0.0
    %52 = vmatpush1.msra.mxu0 0.0
    %53 = vmatprep.subr.mxu0 0.0
    %54 = vmatpush1.msra.mxu0 0.0
    %55 = vmatprep.subr.mxu0 0.0
    %56 = vmatpush1.msra.mxu0 0.0
    %57 = vmatprep.subr.mxu0 0.0
    %58 = vmatpush1.msra.mxu0 0.0
    %59 = vmatprep.subr.mxu0 0.0
    %60 = vmatpush1.msra.mxu0 0.0
    %61 = vmatprep.subr.mxu0 0.0
    %62 = vmatpush1.msra.mxu0 0.0
    %63 = vmatprep.subr.mxu0 0.0
    %64 = vmatpush1.msra.mxu0 0.0
    %65 = vmatprep.subr.mxu0 0.0
    %66 = vmatpush1.msra.mxu0 0.0
    %67 = vmatprep.subr.mxu0 0.0
    %68 = vmatpush1.msra.mxu0 0.0
    %69 = vmatprep.subr.mxu0 0.0
    %70 = vmatpush1.msra.mxu0 0.0
    %71 = vmatprep.subr.mxu0 0.0
    %72 = vmatpush1.msra.mxu0 0.0
    %73 = vmatprep.subr.mxu0 0.0
    %74 = vmatpush1.msra.mxu0 0.0
    %75 = vmatprep.subr.mxu0 0.0
    %76 = vmatpush1.msra.mxu0 0.0
    %77 = vmatprep.subr.mxu0 0.0
    %78 = vmatpush1.msra.mxu0 0.0
    %79 = vmatprep.subr.mxu0 0.0
    %80 = vmatpush1.msra.mxu0 0.0
    %81 = vmatprep.subr.mxu0 0.0
    %82 = vmatpush1.msra.mxu0 0.0
    %83 = vmatprep.subr.mxu0 0.0
    %84 = vmatpush1.msra.mxu0 0.0
    %85 = vmatprep.subr.mxu0 0.0
    %86 = vmatpush1.msra.mxu0 0.0
    %87 = vmatprep.subr.mxu0 0.0
    %88 = vmatpush1.msra.mxu0 0.0
    %89 = vmatprep.subr.mxu0 0.0
    %90 = vmatpush1.msra.mxu0 0.0
    %91 = vmatprep.subr.mxu0 0.0
    %92 = vmatpush1.msra.mxu0 0.0
    %93 = vmatprep.subr.mxu0 0.0
    %94 = vmatpush1.msra.mxu0 0.0
    %95 = vmatprep.subr.mxu0 0.0
    %96 = vmatpush1.msra.mxu0 0.0
    %97 = vmatprep.subr.mxu0 0.0
    %98 = vmatpush1.msra.mxu0 0.0
    %99 = vmatprep.subr.mxu0 0.0
    %100 = vmatpush1.msra.mxu0 0.0
    %101 = vmatprep.subr.mxu0 0.0
    %102 = vmatpush1.msra.mxu0 0.0
    %103 = vmatprep.mubr.f32.mxu0 0.0
    %104 = vmatmul.mubr.f32.gmra.mrb[0].mxu0 %v37
    %v105 = vpop.f32.mrb[0].mxu0
    %v106 = vadd.f32 0.0, %v105
    %v107 = vpop.f32.mrb[0].mxu0
    %v108 = vadd.f32 0.0, %v107
    %109 = vdwg.mxu0
    %v110 = vmul.f32 %v106, 0.33333334
    %v111 = vmul.f32 %v108, 0.33333334
    %112 = vmatprep.subr.mxu0 %v111
    %113 = vmatpush1.xpose.msra.mxu0 %v110
    %114 = vmatprep.subr.mxu0 0.0
    %115 = vmatpush1.xpose.msra.mxu0 0.0
    %116 = vmatprep.subr.mxu0 0.0
    %117 = vmatpush1.xpose.msra.mxu0 0.0
    %118 = vmatprep.subr.mxu0 0.0
    %119 = vmatpush1.xpose.msra.mxu0 0.0
    %120 = vmatprep.subr.mxu0 0.0
    %121 = vmatpush1.xpose.msra.mxu0 0.0
    %122 = vmatprep.subr.mxu0 0.0
    %123 = vmatpush1.xpose.msra.mxu0 0.0
    %124 = vmatprep.subr.mxu0 0.0
    %125 = vmatpush1.xpose.msra.mxu0 0.0
    %126 = vmatprep.subr.mxu0 0.0
    %127 = vmatpush1.xpose.msra.mxu0 0.0
    %128 = vmatprep.subr.mxu0 0.0
    %129 = vmatpush1.xpose.msra.mxu0 0.0
    %130 = vmatprep.subr.mxu0 0.0
    %131 = vmatpush1.xpose.msra.mxu0 0.0
    %132 = vmatprep.subr.mxu0 0.0
    %133 = vmatpush1.xpose.msra.mxu0 0.0
    %134 = vmatprep.subr.mxu0 0.0
    %135 = vmatpush1.xpose.msra.mxu0 0.0
    %136 = vmatprep.subr.mxu0 0.0
    %137 = vmatpush1.xpose.msra.mxu0 0.0
    %138 = vmatprep.subr.mxu0 0.0
    %139 = vmatpush1.xpose.msra.mxu0 0.0
    %140 = vmatprep.subr.mxu0 0.0
    %141 = vmatpush1.xpose.msra.mxu0 0.0
    %142 = vmatprep.subr.mxu0 0.0
    %143 = vmatpush1.xpose.msra.mxu0 0.0
    %144 = vmatprep.subr.mxu0 0.0
    %145 = vmatpush1.xpose.msra.mxu0 0.0
    %146 = vmatprep.subr.mxu0 0.0
    %147 = vmatpush1.xpose.msra.mxu0 0.0
    %148 = vmatprep.subr.mxu0 0.0
    %149 = vmatpush1.xpose.msra.mxu0 0.0
    %150 = vmatprep.subr.mxu0 0.0
    %151 = vmatpush1.xpose.msra.mxu0 0.0
    %152 = vmatprep.subr.mxu0 0.0
    %153 = vmatpush1.xpose.msra.mxu0 0.0
    %154 = vmatprep.subr.mxu0 0.0
    %155 = vmatpush1.xpose.msra.mxu0 0.0
    %156 = vmatprep.subr.mxu0 0.0
    %157 = vmatpush1.xpose.msra.mxu0 0.0
    %158 = vmatprep.subr.mxu0 0.0
    %159 = vmatpush1.xpose.msra.mxu0 0.0
    %160 = vmatprep.subr.mxu0 0.0
    %161 = vmatpush1.xpose.msra.mxu0 0.0
    %162 = vmatprep.subr.mxu0 0.0
    %163 = vmatpush1.xpose.msra.mxu0 0.0
    %164 = vmatprep.subr.mxu0 0.0
    %165 = vmatpush1.xpose.msra.mxu0 0.0
    %166 = vmatprep.subr.mxu0 0.0
    %167 = vmatpush1.xpose.msra.mxu0 0.0
    %168 = vmatprep.subr.mxu0 0.0
    %169 = vmatpush1.xpose.msra.mxu0 0.0
    %170 = vmatprep.subr.mxu0 0.0
    %171 = vmatpush1.xpose.msra.mxu0 0.0
    %172 = vmatprep.subr.mxu0 0.0
    %173 = vmatpush1.xpose.msra.mxu0 0.0
    %174 = vmatprep.subr.mxu0 0.0
    %175 = vmatpush1.xpose.msra.mxu0 0.0
    %176 = vmatprep.mubr.f32.mxu0 %v19
    %177 = vmatmul.mubr.f32.gmra.mrb[0].mxu0 %v18
    %v178 = vpop.f32.mrb[0].mxu0
    %v179 = vadd.f32 0.0, %v178
    %v180 = vpop.f32.mrb[0].mxu0
    %181 = vmatprep.mubr.f32.mxu0 %v21
    %182 = vmatmul.mubr.f32.gmra.mrb[0].mxu0 %v20
    %v183 = vpop.f32.mrb[0].mxu0
    %v184 = vadd.f32 0.0, %v183
    %v185 = vpop.f32.mrb[0].mxu0
    %186 = vmatprep.mubr.f32.mxu0 %v23
    %187 = vmatmul.mubr.f32.gmra.mrb[0].mxu0 %v22
    %v188 = vpop.f32.mrb[0].mxu0
    %v189 = vadd.f32 0.0, %v188
    %v190 = vpop.f32.mrb[0].mxu0
    %191 = vmatprep.mubr.f32.mxu0 %v25
    %192 = vmatmul.mubr.f32.gmra.mrb[0].mxu0 %v24
    %v193 = vpop.f32.mrb[0].mxu0
    %v194 = vadd.f32 0.0, %v193
    %v195 = vpop.f32.mrb[0].mxu0
    %196 = vdwg.mxu0
    %v197 = vmul.f32 %v110, %v110
    %v198 = vmul.f32 %v111, %v111
    %199 = vmatprep.subr.mxu0 %v198
    %200 = vmatpush1.xpose.msra.mxu0 %v197
    %201 = vmatprep.subr.mxu0 0.0
    %202 = vmatpush1.xpose.msra.mxu0 0.0
    %203 = vmatprep.subr.mxu0 0.0
    %204 = vmatpush1.xpose.msra.mxu0 0.0
    %205 = vmatprep.subr.mxu0 0.0
    %206 = vmatpush1.xpose.msra.mxu0 0.0
    %207 = vmatprep.subr.mxu0 0.0
    %208 = vmatpush1.xpose.msra.mxu0 0.0
    %209 = vmatprep.subr.mxu0 0.0
    %210 = vmatpush1.xpose.msra.mxu0 0.0
    %211 = vmatprep.subr.mxu0 0.0
    %212 = vmatpush1.xpose.msra.mxu0 0.0
    %213 = vmatprep.subr.mxu0 0.0
    %214 = vmatpush1.xpose.msra.mxu0 0.0
    %215 = vmatprep.subr.mxu0 0.0
    %216 = vmatpush1.xpose.msra.mxu0 0.0
    %217 = vmatprep.subr.mxu0 0.0
    %218 = vmatpush1.xpose.msra.mxu0 0.0
    %219 = vmatprep.subr.mxu0 0.0
    %220 = vmatpush1.xpose.msra.mxu0 0.0
    %221 = vmatprep.subr.mxu0 0.0
    %222 = vmatpush1.xpose.msra.mxu0 0.0
    %223 = vmatprep.subr.mxu0 0.0
    %224 = vmatpush1.xpose.msra.mxu0 0.0
    %225 = vmatprep.subr.mxu0 0.0
    %226 = vmatpush1.xpose.msra.mxu0 0.0
    %227 = vmatprep.subr.mxu0 0.0
    %228 = vmatpush1.xpose.msra.mxu0 0.0
    %229 = vmatprep.subr.mxu0 0.0
    %230 = vmatpush1.xpose.msra.mxu0 0.0
    %231 = vmatprep.subr.mxu0 0.0
    %232 = vmatpush1.xpose.msra.mxu0 0.0
    %233 = vmatprep.subr.mxu0 0.0
    %234 = vmatpush1.xpose.msra.mxu0 0.0
    %235 = vmatprep.subr.mxu0 0.0
    %236 = vmatpush1.xpose.msra.mxu0 0.0
    %237 = vmatprep.subr.mxu0 0.0
    %238 = vmatpush1.xpose.msra.mxu0 0.0
    %239 = vmatprep.subr.mxu0 0.0
    %240 = vmatpush1.xpose.msra.mxu0 0.0
    %241 = vmatprep.subr.mxu0 0.0
    %242 = vmatpush1.xpose.msra.mxu0 0.0
    %243 = vmatprep.subr.mxu0 0.0
    %244 = vmatpush1.xpose.msra.mxu0 0.0
    %245 = vmatprep.subr.mxu0 0.0
    %246 = vmatpush1.xpose.msra.mxu0 0.0
    %247 = vmatprep.subr.mxu0 0.0
    %248 = vmatpush1.xpose.msra.mxu0 0.0
    %249 = vmatprep.subr.mxu0 0.0
    %250 = vmatpush1.xpose.msra.mxu0 0.0
    %251 = vmatprep.subr.mxu0 0.0
    %252 = vmatpush1.xpose.msra.mxu0 0.0
    %253 = vmatprep.subr.mxu0 0.0
    %254 = vmatpush1.xpose.msra.mxu0 0.0
    %255 = vmatprep.subr.mxu0 0.0
    %256 = vmatpush1.xpose.msra.mxu0 0.0
    %257 = vmatprep.subr.mxu0 0.0
    %258 = vmatpush1.xpose.msra.mxu0 0.0
    %259 = vmatprep.subr.mxu0 0.0
    %260 = vmatpush1.xpose.msra.mxu0 0.0
    %261 = vmatprep.subr.mxu0 0.0
    %262 = vmatpush1.xpose.msra.mxu0 0.0
    %263 = vmatprep.mubr.f32.mxu0 1.0
    %264 = vmatmul.mubr.f32.gmra.mrb[0].mxu0 1.0
    %v265 = vpop.f32.mrb[0].mxu0
    %v266 = vadd.f32 0.0, %v265
    %v267 = vpop.f32.mrb[0].mxu0
    %268 = vdwg.mxu0
    %p269 = scmp.eq.s32.totalorder 0, 0
    // Predicated region
    $region14: #{_episode_loss.1} parent=1 // pred_check
      %p270 = pneg %p269
    $region15: #{_episode_loss.1} parent=1 // pred_check_branch
      %272 = sbr.rel (%p270) target = $region17
    $region16: #{_episode_loss.1} parent=1 // pred_region
      %vm273 = vcmask 64512
      %274 = vst.msk [vmem:[#allocation2] sm:$0xff] %vm273, %v179
      %275 = vst.msk [vmem:[#allocation2 + $0x8] sm:$0xff] %vm273, %v184
      %276 = vst.msk [vmem:[#allocation2 + $0x10] sm:$0xff] %vm273, %v189
      %277 = vst.msk [vmem:[#allocation2 + $0x18] sm:$0xff] %vm273, %v194
      %vm278 = vcmask 57344
      %279 = vst.msk [vmem:[#allocation3] sm:$0x1] %vm278, %v266
    $region17: #{_episode_loss.1} parent=1 // pred_fallthru
      _
    %p280 = scmp.gt.s32.totalorder 0, 0
    // Predicated region
    $region18: #{_episode_loss.1} parent=1 // pred_check
      %p281 = pneg %p280
    $region19: #{_episode_loss.1} parent=1 // pred_check_branch
      %283 = sbr.rel (%p281) target = $region21
    $region20: #{_episode_loss.1} parent=1 // pred_region
      %v284 = vld [vmem:[#allocation2] sm:$0xff]
      %v285 = vld [vmem:[#allocation2 + $0x8] sm:$0xff]
      %v286 = vld [vmem:[#allocation2 + $0x10] sm:$0xff]
      %v287 = vld [vmem:[#allocation2 + $0x18] sm:$0xff]
      %v288 = vadd.f32 %v284, %v179
      %v289 = vadd.f32 %v285, %v184
      %v290 = vadd.f32 %v286, %v189
      %v291 = vadd.f32 %v287, %v194
      %vm292 = vcmask 64512
      %293 = vst.msk [vmem:[#allocation2] sm:$0xff] %vm292, %v288
      %294 = vst.msk [vmem:[#allocation2 + $0x8] sm:$0xff] %vm292, %v289
      %295 = vst.msk [vmem:[#allocation2 + $0x10] sm:$0xff] %vm292, %v290
      %296 = vst.msk [vmem:[#allocation2 + $0x18] sm:$0xff] %vm292, %v291
      %v297 = vld [vmem:[#allocation3] sm:$0x1]
      %v298 = vadd.f32 %v297, %v266
      %vm299 = vcmask 57344
      %300 = vst.msk [vmem:[#allocation3] sm:$0x1] %vm299, %v298
    $region21: #{_episode_loss.1} parent=1 // pred_fallthru
      _
    // Predicated region
    $region22: #{_episode_loss.1} parent=1 // pred_check
      %p301 = pneg %p269
    $region23: #{_episode_loss.1} parent=1 // pred_check_branch
      %303 = sbr.rel (%p301) target = $region25
    $region24: #{_episode_loss.1} parent=1 // pred_region
      %v304 = vld [vmem:[#allocation2] sm:$0xff]
      %v305 = vld [vmem:[#allocation2 + $0x8] sm:$0xff]
      %v306 = vld [vmem:[#allocation2 + $0x10] sm:$0xff]
      %v307 = vld [vmem:[#allocation2 + $0x18] sm:$0xff]
      %v308 = vmul.f32 %v304, 2.0
      %v309 = vmul.f32 %v305, 2.0
      %v310 = vmul.f32 %v306, 2.0
      %v311 = vmul.f32 %v307, 2.0
      %v312 = vld [vmem:[#allocation3] sm:$0x1]
      %v314 = vlaneseq
      %v315 = vshrl.u32 %v314, 7
      %v316 = vsub.s32 0, %v315
      %v317 = vrot.slane %v312, %v316
      %v319 = vsub.f32 %v308, %v317
      %v320 = vsub.f32 %v309, %v317
      %v321 = vsub.f32 %v310, %v317
      %v322 = vsub.f32 %v311, %v317
      %v323 = vlaneseq
      %v324 = vand.u32 %v323, 127
      %vm325 = vcmp.lt.s32.totalorder %v324, 4
      %v326 = vsel %vm325, %v319, -1e+30
      %v327 = vsel %vm325, %v320, -1e+30
      %v328 = vsel %vm325, %v321, -1e+30
      %v329 = vsel %vm325, %v322, -1e+30
      %vm330 = vcmask 64512
      %v331 = vsel %vm330, %v326, -inf
      %332 = vmax.xlane.f32.xlu0 %v331
      %v333 = vpop.xlane.xlu0 %332
      %v334 = vsel %vm330, %v327, -inf
      %335 = vmax.xlane.f32.xlu0 %v334
      %v336 = vpop.xlane.xlu0 %335
      %v337 = vsel %vm330, %v328, -inf
      %338 = vmax.xlane.f32.xlu0 %v337
      %v339 = vpop.xlane.xlu0 %338
      %v340 = vsel %vm330, %v329, -inf
      %341 = vmax.xlane.f32.xlu0 %v340
      %v342 = vpop.xlane.xlu0 %341
      %v343 = vsub.f32 %v326, %v333
      %v344 = vsub.f32 %v327, %v336
      %v345 = vsub.f32 %v328, %v339
      %v346 = vsub.f32 %v329, %v342
      %v347 = vmul.f32 %v343, 1.442695
      %v348 = vpow.pop %v347
      %v349 = vmul.f32 %v344, 1.442695
      %v350 = vpow.pop %v349
      %v351 = vmul.f32 %v345, 1.442695
      %v352 = vpow.pop %v351
      %v353 = vmul.f32 %v346, 1.442695
      %v354 = vpow.pop %v353
      %v355 = vsel %vm330, %v348, 0.0
      %356 = vadd.xlane.f32.xlu0 %v355
      %v357 = vpop.xlane.xlu0 %356
      %v358 = vsel %vm330, %v350, 0.0
      %359 = vadd.xlane.f32.xlu0 %v358
      %v360 = vpop.xlane.xlu0 %359
      %v361 = vsel %vm330, %v352, 0.0
      %362 = vadd.xlane.f32.xlu0 %v361
      %v363 = vpop.xlane.xlu0 %362
      %v364 = vsel %vm330, %v354, 0.0
      %365 = vadd.xlane.f32.xlu0 %v364
      %v366 = vpop.xlane.xlu0 %365
      %v367 = vlog2.pop %v357
      %v368 = vmul.f32 %v367, 0.6931472
      %v369 = vlog2.pop %v360
      %v370 = vmul.f32 %v369, 0.6931472
      %v371 = vlog2.pop %v363
      %v372 = vmul.f32 %v371, 0.6931472
      %v373 = vlog2.pop %v366
      %v374 = vmul.f32 %v373, 0.6931472
      %v375 = vsub.f32 %v343, %v368
      %v376 = vsub.f32 %v344, %v370
      %v377 = vsub.f32 %v345, %v372
      %v378 = vsub.f32 %v346, %v374
      %v379 = vld [vmem:[%s2] sm:$0xff]
      %v380 = vld [vmem:[%s2 + $0x8] sm:$0xff]
      %v381 = vld [vmem:[%s2 + $0x10] sm:$0xff]
      %v382 = vld [vmem:[%s2 + $0x18] sm:$0xff]
      %383 = vset.pattern.permute.xlu0 0
      %384 = vperm.xlu0 %383, %v379
      %v385 = vpop.permute.xlu0 %384
      %386 = vset.pattern.permute.xlu0 0
      %387 = vperm.xlu0 %386, %v380
      %v388 = vpop.permute.xlu0 %387
      %389 = vset.pattern.permute.xlu0 0
      %390 = vperm.xlu0 %389, %v381
      %v391 = vpop.permute.xlu0 %390
      %392 = vset.pattern.permute.xlu0 0
      %393 = vperm.xlu0 %392, %v382
      %v394 = vpop.permute.xlu0 %393
      %vm395 = vcmp.eq.s32.totalorder %v324, %v385
      %vm396 = vcmp.eq.s32.totalorder %v324, %v388
      %vm397 = vcmp.eq.s32.totalorder %v324, %v391
      %vm398 = vcmp.eq.s32.totalorder %v324, %v394
      %v399 = vsel %vm395, %v375, 0.0
      %v400 = vsel %vm396, %v376, 0.0
      %v401 = vsel %vm397, %v377, 0.0
      %v402 = vsel %vm398, %v378, 0.0
      %v403 = vsel %vm330, %v399, 0.0
      %v404 = vsel %vm330, %v400, 0.0
      %v405 = vadd.f32 %v403, %v404
      %v406 = vsel %vm330, %v401, 0.0
      %v407 = vadd.f32 %v405, %v406
      %v408 = vsel %vm330, %v402, 0.0
      %v409 = vadd.f32 %v407, %v408
      %410 = vadd.xlane.f32.xlu0 %v409
      %v411 = vpop.xlane.xlu0 %410
      %v412 = vrot.slane %v411, 4
      %v413 = vadd.f32 %v411, %v412
      %v414 = vrot.slane %v413, 2
      %v415 = vadd.f32 %v413, %v414
      %v416 = vrot.slane %v415, 1
      %v417 = vadd.f32 %v415, %v416
      %s418 = vtos %v417
      %s419 = ssub.f32 0.0, %s418
      %s420 = smul.f32 %s419, 0.05
      %s421 = scalar_lea.smem [#allocation4], 0
      %422 = sst [smem:[%s421]] %s420
      %v423 = vsel %vm330, %v375, -inf
      %424 = vmax.xlane.f32.xlu0 %v423
      %v425 = vpop.xlane.xlu0 %424
      %v426 = vsel %vm330, %v376, -inf
      %427 = vmax.xlane.f32.xlu0 %v426
      %v428 = vpop.xlane.xlu0 %427
      %v429 = vsel %vm330, %v377, -inf
      %430 = vmax.xlane.f32.xlu0 %v429
      %v431 = vpop.xlane.xlu0 %430
      %v432 = vsel %vm330, %v378, -inf
      %433 = vmax.xlane.f32.xlu0 %v432
      %v434 = vpop.xlane.xlu0 %433
      %vm435 = vcmp.eq.f32.partialorder %v375, %v425
      %vm436 = vcmp.eq.f32.partialorder %v376, %v428
      %vm437 = vcmp.eq.f32.partialorder %v377, %v431
      %vm438 = vcmp.eq.f32.partialorder %v378, %v434
      %v439 = vsel %vm435, %v324, 8
      %v440 = vsel %vm436, %v324, 8
      %v441 = vsel %vm437, %v324, 8
      %v442 = vsel %vm438, %v324, 8
      %v443 = vsel %vm330, %v439, 2147483647
      %v444 = vand.u32 %v443, 65535
      %v445 = vshra.s32 %v443, 16
      %v446 = vcvt.s32.f32 %v444
      %v447 = vcvt.s32.f32 %v445
      %448 = vmin.xlane.f32.xlu0 %v447
      %v449 = vpop.xlane.xlu0 %448
      %vm450 = vcmp.eq.f32.partialorder %v447, %v449
      %v451 = vsel %vm450, %v446, inf
      %452 = vmin.xlane.f32.xlu0 %v451
      %v453 = vpop.xlane.xlu0 %452
      %v454 = vcvt.f32.s32 %v453
      %v455 = vcvt.f32.s32 %v449
      %v456 = vshll.u32 %v455, 16
      %v457 = vadd.s32 %v456, %v454
      %v458 = vsel %vm330, %v440, 2147483647
      %v459 = vand.u32 %v458, 65535
      %v460 = vshra.s32 %v458, 16
      %v461 = vcvt.s32.f32 %v459
      %v462 = vcvt.s32.f32 %v460
      %463 = vmin.xlane.f32.xlu0 %v462
      %v464 = vpop.xlane.xlu0 %463
      %vm465 = vcmp.eq.f32.partialorder %v462, %v464
      %v466 = vsel %vm465, %v461, inf
      %467 = vmin.xlane.f32.xlu0 %v466
      %v468 = vpop.xlane.xlu0 %467
      %v469 = vcvt.f32.s32 %v468
      %v470 = vcvt.f32.s32 %v464
      %v471 = vshll.u32 %v470, 16
      %v472 = vadd.s32 %v471, %v469
      %v473 = vsel %vm330, %v441, 2147483647
      %v474 = vand.u32 %v473, 65535
      %v475 = vshra.s32 %v473, 16
      %v476 = vcvt.s32.f32 %v474
      %v477 = vcvt.s32.f32 %v475
      %478 = vmin.xlane.f32.xlu0 %v477
      %v479 = vpop.xlane.xlu0 %478
      %vm480 = vcmp.eq.f32.partialorder %v477, %v479
      %v481 = vsel %vm480, %v476, inf
      %482 = vmin.xlane.f32.xlu0 %v481
      %v483 = vpop.xlane.xlu0 %482
      %v484 = vcvt.f32.s32 %v483
      %v485 = vcvt.f32.s32 %v479
      %v486 = vshll.u32 %v485, 16
      %v487 = vadd.s32 %v486, %v484
      %v488 = vsel %vm330, %v442, 2147483647
      %v489 = vand.u32 %v488, 65535
      %v490 = vshra.s32 %v488, 16
      %v491 = vcvt.s32.f32 %v489
      %v492 = vcvt.s32.f32 %v490
      %493 = vmin.xlane.f32.xlu0 %v492
      %v494 = vpop.xlane.xlu0 %493
      %vm495 = vcmp.eq.f32.partialorder %v492, %v494
      %v496 = vsel %vm495, %v491, inf
      %497 = vmin.xlane.f32.xlu0 %v496
      %v498 = vpop.xlane.xlu0 %497
      %v499 = vcvt.f32.s32 %v498
      %v500 = vcvt.f32.s32 %v494
      %v501 = vshll.u32 %v500, 16
      %v502 = vadd.s32 %v501, %v499
      %vm503 = vcmp.eq.s32.totalorder %v457, %v379
      %vm504 = vcmp.eq.s32.totalorder %v472, %v380
      %vm505 = vcmp.eq.s32.totalorder %v487, %v381
      %vm506 = vcmp.eq.s32.totalorder %v502, %v382
      %v507 = vsel %vm503, 1, 0
      %v508 = vsel %vm504, 1, 0
      %v509 = vsel %vm505, 1, 0
      %v510 = vsel %vm506, 1, 0
      %v511 = vcvt.s32.f32 %v507
      %v512 = vcvt.s32.f32 %v508
      %v513 = vcvt.s32.f32 %v509
      %v514 = vcvt.s32.f32 %v510
      %vm515 = vcmask 7168
      %v516 = vsel %vm515, %v511, 0.0
      %v517 = vsel %vm515, %v512, 0.0
      %v518 = vadd.f32 %v516, %v517
      %v519 = vsel %vm515, %v513, 0.0
      %v520 = vadd.f32 %v518, %v519
      %v521 = vsel %vm515, %v514, 0.0
      %v522 = vadd.f32 %v520, %v521
      %523 = vadd.xlane.f32.xlu0 %v522
      %v524 = vpop.xlane.xlu0 %523
      %v525 = vrot.slane %v524, 4
      %v526 = vadd.f32 %v524, %v525
      %v527 = vrot.slane %v526, 2
      %v528 = vadd.f32 %v526, %v527
      %v529 = vrot.slane %v528, 1
      %v530 = vadd.f32 %v528, %v529
      %s531 = vtos %v530
      %s532 = smul.f32 %s531, 0.05
      %s533 = scalar_lea.smem [#allocation6], 0
      %534 = sst [smem:[%s533]] %s532
    $region25: #{_episode_loss.1} parent=1 // pred_fallthru
      _
    // Predicated region
    $region26: #{_episode_loss.1} parent=1 // pred_check
      _
    $region27: #{_episode_loss.1} parent=1 // pred_check_branch
      %536 = sbr.rel (0) target = $region29
    $region28: #{_episode_loss.1} parent=1 // pred_region
      %s538 = ssub.s32 16, 16
      %539 = vsyncadd [#allocation5], %s538
      %542 = dma.smem_to_hbm [#allocation4], 16, %s3, [#allocation5]
    $region29: #{_episode_loss.1} parent=1 // pred_fallthru
      _
    // Predicated region
    $region30: #{_episode_loss.1} parent=1 // pred_check
      _
    $region31: #{_episode_loss.1} parent=1 // pred_check_branch
      %544 = sbr.rel (0) target = $region33
    $region32: #{_episode_loss.1} parent=1 // pred_region
      %s546 = ssub.s32 16, 16
      %547 = vsyncadd [#allocation7], %s546
      %550 = dma.smem_to_hbm [#allocation6], 16, %s4, [#allocation7]
    $region33: #{_episode_loss.1} parent=1 // pred_fallthru
      _
    // Predicated region
    $region34: #{_episode_loss.1} parent=1 // pred_check
      _
    $region35: #{_episode_loss.1} parent=1 // pred_check_branch
      %552 = sbr.rel (0) target = $region37
    $region36: #{_episode_loss.1} parent=1 // pred_region
      %553 = dma.done [#allocation5], 16
    $region37: #{_episode_loss.1} parent=1 // pred_fallthru
      _
    // Predicated region
    $region38: #{_episode_loss.1} parent=1 // pred_check
      _
    $region39: #{_episode_loss.1} parent=1 // pred_check_branch
      %555 = sbr.rel (0) target = $region41
    $region40: #{_episode_loss.1} parent=1 // pred_region
      %556 = dma.done [#allocation7], 16
    $region41: #{_episode_loss.1} parent=1 // pred_fallthru
      _
    %557 = sfence
    %558 = vsyncpa [#allocation5], 1
    %559 = vsyncpa [#allocation7], 1

</llo_original>
